<compile_context>
chip_gen: v6e
topology: v6e:2x2x1
jax: 0.10.0
libtpu: 0.0.40
codegen_flags: <defaults>
</compile_context>

<pallas_src>
import jax
import jax.numpy as jnp
from jax.experimental import pallas as pl
from jax.experimental.pallas import tpu as pltpu

BC = 2  # samples per grid step (block-diagonal MXU batch); K = 48*BC = 96 <= 128 (v5e safe)


def mda_forward(x1, x2, params):
    """MDA.forward(x1, x2): x1, x2 are NCHW (B, 2, H, W); returns (B, 1, 2H, 2W)."""
    B, C2, H, W = x1.shape
    assert C2 == 2 and x2.shape == x1.shape
    HW = H * W
    KPS = 48            # per-sample contraction: 36 channel taps + 9 mask + 1 ones + 2 pad
    M = 4 * BC          # MXU rows per step
    K = KPS * BC        # MXU contraction per step

    # ---- Dynamic_conv2d attention over K=4 kernels (tiny per-sample MLP; glue) ----
    # pooled over cat(x1, x2, dim=1) without materializing the concat in HBM.
    pooled = jnp.concatenate([x1.mean(axis=(2, 3)), x2.mean(axis=(2, 3))], axis=1)  # (B, 4)
    hid = jnp.maximum(pooled @ params["att_fc1_w"].T, 0.0)                          # (B, 2)
    logits = hid @ params["att_fc2_w"].T + params["att_fc2_b"]                      # (B, 4)
    attn = jax.nn.softmax(logits, axis=-1)                                          # (B, K=4)
    w1 = attn @ params["dyn_w"]                                                     # (B, 8)
    b1 = attn @ params["dyn_b"]                                                     # (B, 8)

    conv_w = params["conv_w"]                                                       # (4, 8, 3, 3)
    conv_b = params["conv_b"]                                                       # (4,)

    # ---- Fold the per-sample dynamic 1x1 grouped conv into the 3x3 conv weights ----
    # y[oc] = x[oc//2]*w1[oc] + b1[oc]  (grouped 1x1, groups=4)
    # z[co] = conv_b[co] + sum_{oc,kh,kw} conv_w[co,oc,kh,kw] * zero_pad(y)[oc, .+kh-1, .+kw-1]
    # Per-sample folded columns t (matched against the in-kernel stack rows):
    #   t = (kh*3+kw)*4 + ic : sum_j conv_w[co, 2ic+j, kh, kw] * w1[b, 2ic+j]
    #   t = 36 + (kh*3+kw)   : sum_oc conv_w[co, oc, kh, kw] * b1[b, oc]   (x border mask)
    #   t = 45               : conv_b[co]                                  (x ones row)
    #   t = 46, 47           : 0
    cw = conv_w.reshape(4, 4, 2, 3, 3)                                # (co, ic, j, kh, kw)
    w_ch = jnp.einsum("oijkl,bij->bokli", cw, w1.reshape(B, 4, 2)).reshape(B, 4, 36)
    w_bias = jnp.einsum("oqkl,bq->bokl", conv_w, b1).reshape(B, 4, 9)
    w_b2 = jnp.broadcast_to(conv_b[None, :, None], (B, 4, 1))
    w_aug = jnp.concatenate(
        [w_ch, w_bias, w_b2, jnp.zeros((B, 4, 2), jnp.float32)], axis=-1)  # (B, 4, 48) f32

    # ---- Pad batch to a multiple of BC and build block-diagonal per-chunk weights ----
    x1f = x1.reshape(B, 2, HW)            # lane-dense spatial slab (free reshape)
    x2f = x2.reshape(B, 2, HW)
    Bpad = ((B + BC - 1) // BC) * BC
    if Bpad != B:
        pad = Bpad - B
        x1f = jnp.pad(x1f, ((0, pad), (0, 0), (0, 0)))
        x2f = jnp.pad(x2f, ((0, pad), (0, 0), (0, 0)))
        w_aug = jnp.pad(w_aug, ((0, pad), (0, 0), (0, 0)))
    num_chunks = Bpad // BC

    # block-diagonal: w_old[c, s*4+o, d*48+t] = (s==d) * w_aug[c*BC+s, o, t]
    w_aug_r = w_aug.reshape(num_chunks, BC, 4, KPS)
    eye = jnp.eye(BC, dtype=jnp.float32)
    w_old = (w_aug_r[:, :, :, None, :] * eye[None, :, None, :, None]).reshape(num_chunks, M, K)
    # permute columns to the interleaved stack layout used in-kernel:
    #   rows 8*t9 + 4*s + ic  -> tap t9, sample s, channel ic
    #   rows 36*BC + 12*s + m -> mask/ones/zero row m of sample s
    perm = []
    for j in range(K):
        if j < 36 * BC:
            t9, r = divmod(j, 4 * BC)
            d, ic = divmod(r, 4)
            perm.append(d * KPS + 4 * t9 + ic)
        else:
            d, m = divmod(j - 36 * BC, 12)
            perm.append(d * KPS + 36 + m)
    w_blk = w_old[:, :, jnp.array(perm)].astype(jnp.bfloat16)         # (num_chunks, 8, 96)

    # ---- Static border masks (depend only on H, W): 9 masks + ones + 2 zero rows ----
    hh = jnp.arange(H).reshape(H, 1)
    ww = jnp.arange(W).reshape(1, W)
    mask_list = []
    for a in (-1, 0, 1):
        for c in (-1, 0, 1):
            valid = (hh + a >= 0) & (hh + a < H) & (ww + c >= 0) & (ww + c < W)
            mask_list.append(valid.reshape(1, HW))
    mask12 = jnp.concatenate(
        mask_list + [jnp.ones((1, HW), bool), jnp.zeros((2, HW), bool)], axis=0
    ).astype(jnp.float32)                                             # (12, HW)
    mask_rows = jnp.concatenate([mask12] * BC, axis=0)                # (12*BC, HW)

    def mda_kernel(x1_ref, x2_ref, w_ref, m_ref, o_ref, stack_ref):
        # x1_ref/x2_ref: (BC, 2, HW) f32   two channels per tensor, lanes = flattened HW
        # w_ref:         (1, 4*BC, 48*BC) bf16 block-diagonal folded weights
        # m_ref:         (12*BC, HW) f32   border masks + ones + zero rows (x BC)
        # o_ref:         (1, 4*BC, HW) f32 sigmoid(conv) output (pixel shuffle in glue)
        # stack_ref:     (48*BC, HW) f32   persistent VMEM scratch for the im2col stack
        parts = []
        for s in range(BC):                       # channel-stack both samples once
            parts.append(x1_ref[s])
            parts.append(x2_ref[s])
        xa = jnp.concatenate(parts, axis=0)       # (4*BC, HW) = (8, 256)
        for a in (-1, 0, 1):
            for c in (-1, 0, 1):
                t9 = (a + 1) * 3 + (c + 1)
                shift = a * W + c                 # flattened tap offset
                if shift == 0:
                    tap = xa                      # center tap: always valid, no mask
                else:
                    # jnp.roll semantics: roll(x, k)[p] == x[(p - k) % N], so
                    # k = (-shift) % HW gives rolled[p] == xa[p + shift]; out-of-image
                    # neighbours (incl. row wrap) are zeroed by the border mask.
                    tap = pltpu.roll(xa, (-shift) % HW, 1) * m_ref[t9:t9 + 1, :]
                # one aligned 8-sublane store per tap (both samples interleaved)
                stack_ref[4 * BC * t9: 4 * BC * (t9 + 1), :] = tap
        stack_ref[36 * BC: 48 * BC, :] = m_ref[...]   # bias-mask / ones / zero rows
        z = jnp.dot(w_ref[0], stack_ref[...].astype(jnp.bfloat16),
                    preferred_element_type=jnp.float32)   # (8, HW) single MXU matmul
        o_ref[0] = 0.5 * jnp.tanh(0.5 * z) + 0.5          # stable sigmoid on the EUP

    out = pl.pallas_call(
        mda_kernel,
        out_shape=jax.ShapeDtypeStruct((num_chunks, M, HW), jnp.float32),
        grid=(num_chunks,),
        in_specs=[
            pl.BlockSpec((BC, 2, HW), lambda c: (c, 0, 0)),
            pl.BlockSpec((BC, 2, HW), lambda c: (c, 0, 0)),
            pl.BlockSpec((1, M, K), lambda c: (c, 0, 0)),
            pl.BlockSpec((12 * BC, HW), lambda c: (0, 0)),
        ],
        out_specs=pl.BlockSpec((1, M, HW), lambda c: (c, 0, 0)),
        scratch_shapes=[pltpu.VMEM((K, HW), jnp.float32)],
        compiler_params=pltpu.CompilerParams(dimension_semantics=("parallel",)),
    )(x1f, x2f, w_blk, mask_rows)

    out_flat = out.reshape(Bpad, 4, HW)[:B]       # drop padded samples (free reshape)
    # PixelShuffle(2): (B, 4, H, W) -> (B, 1, 2H, 2W); sigmoid already applied in-kernel
    # (it commutes with this permutation).
    o = out_flat.reshape(B, 1, 2, 2, H, W).transpose(0, 1, 4, 2, 5, 3)
    return o.reshape(B, 1, 2 * H, 2 * W)


def mda_reference(x1, x2, params):
    """Pure-JAX reference of the same forward (for correctness checking)."""
    x = jnp.concatenate([x1, x2], axis=1)                        # (B, 4, H, W)
    B, _, H, W = x.shape
    pooled = jnp.mean(x, axis=(2, 3))
    hid = jnp.maximum(pooled @ params["att_fc1_w"].T, 0.0)
    attn = jax.nn.softmax(hid @ params["att_fc2_w"].T + params["att_fc2_b"], axis=-1)
    w1 = attn @ params["dyn_w"]
    b1 = attn @ params["dyn_b"]
    y = x[:, jnp.arange(8) // 2] * w1[:, :, None, None] + b1[:, :, None, None]  # (B,8,H,W)
    yp = jnp.pad(y, ((0, 0), (0, 0), (1, 1), (1, 1)))
    z = jnp.broadcast_to(params["conv_b"][None, :, None, None], (B, 4, H, W))
    for kh in range(3):
        for kw in range(3):
            z = z + jnp.einsum("oq,bqhw->bohw", params["conv_w"][:, :, kh, kw],
                               yp[:, :, kh:kh + H, kw:kw + W])
    s = jax.nn.sigmoid(z)
    return s.reshape(B, 1, 2, 2, H, W).transpose(0, 1, 4, 2, 5, 3).reshape(B, 1, 2 * H, 2 * W)


def make_params(key):
    ks = jax.random.split(key, 7)
    return {
        # Dynamic_conv2d(in=4, out=8, k=1, groups=4, K=4): weight (K, out, 1, 1, 1) -> (K, out)
        "dyn_w": 0.2 * jax.random.normal(ks[0], (4, 8), jnp.float32),
        "dyn_b": 0.1 * jax.random.normal(ks[1], (4, 8), jnp.float32),
        # attention2d: fc1 (hidden=int(4*0.25)+1=2, no bias), fc2 (K=4, with bias)
        "att_fc1_w": 0.3 * jax.random.normal(ks[2], (2, 4), jnp.float32),
        "att_fc2_w": 0.3 * jax.random.normal(ks[3], (4, 2), jnp.float32),
        "att_fc2_b": 0.05 * jax.random.normal(ks[4], (4,), jnp.float32),
        # upsample Conv2d(8, 4, 3, padding=1)
        "conv_w": 0.1 * jax.random.normal(ks[5], (4, 8, 3, 3), jnp.float32),
        "conv_b": 0.05 * jax.random.normal(ks[6], (4,), jnp.float32),
    }


if __name__ == "__main__":
    B, H, W = 2, 16, 16
    key = jax.random.PRNGKey(0)
    kp, kx1, kx2 = jax.random.split(key, 3)
    params = make_params(kp)
    x1 = jax.random.normal(kx1, (B, 2, H, W), jnp.float32)
    x2 = jax.random.normal(kx2, (B, 2, H, W), jnp.float32)

    out = jax.jit(mda_forward)(x1, x2, params)
    jax.block_until_ready(out)

    assert out.shape == (B, 1, 2 * H, 2 * W)
    assert bool(jnp.all(jnp.isfinite(out)))
    ref = mda_reference(x1, x2, params)
    max_err = float(jnp.max(jnp.abs(out - ref)))
    assert max_err < 5e-2, f"mismatch vs reference: {max_err}"
    print("KERNEL_OK")
</pallas_src>

<mosaic_0001>
module attributes {stable_mosaic.version = 11 : i64} {
  func.func @mda_kernel(%arg0: i32, %arg1: memref<2x2x256xf32, #tpu.memory_space<vmem>>, %arg2: memref<2x2x256xf32, #tpu.memory_space<vmem>>, %arg3: memref<1x8x96xbf16, #tpu.memory_space<vmem>>, %arg4: memref<24x256xf32, #tpu.memory_space<vmem>>, %arg5: memref<1x8x256xf32, #tpu.memory_space<vmem>>, %arg6: memref<96x256xf32, #tpu.memory_space<vmem>>) attributes {dimension_semantics = [#tpu.dimension_semantics<parallel>], iteration_bounds = array<i64: 1>, scalar_prefetch = 0 : i64, scratch_operands = 1 : i64, tpu.core_type = #tpu.core_type<tc>, window_params = [{transform_indices = @transform_0, window_bounds = array<i64: 2, 2, 256>}, {transform_indices = @transform_1, window_bounds = array<i64: 2, 2, 256>}, {transform_indices = @transform_2, window_bounds = array<i64: 1, 8, 96>}, {pipeline_mode = #tpu.pipeline_mode<synchronous>, transform_indices = @transform_3, window_bounds = array<i64: 24, 256>}, {transform_indices = @transform_4, window_bounds = array<i64: 1, 8, 256>}]} {
    %c0 = arith.constant 0 : index
    %c0_0 = arith.constant 0 : index
    %c0_1 = arith.constant 0 : index
    %0 = vector.load %arg1[%c0, %c0_0, %c0_1] : memref<2x2x256xf32, #tpu.memory_space<vmem>>, vector<1x2x256xf32>
    %1 = vector.shape_cast %0 : vector<1x2x256xf32> to vector<2x256xf32>
    %c0_2 = arith.constant 0 : index
    %c0_3 = arith.constant 0 : index
    %c0_4 = arith.constant 0 : index
    %2 = vector.load %arg2[%c0_2, %c0_3, %c0_4] : memref<2x2x256xf32, #tpu.memory_space<vmem>>, vector<1x2x256xf32>
    %3 = vector.shape_cast %2 : vector<1x2x256xf32> to vector<2x256xf32>
    %c1 = arith.constant 1 : index
    %c0_5 = arith.constant 0 : index
    %c0_6 = arith.constant 0 : index
    %4 = vector.load %arg1[%c1, %c0_5, %c0_6] : memref<2x2x256xf32, #tpu.memory_space<vmem>>, vector<1x2x256xf32>
    %5 = vector.shape_cast %4 : vector<1x2x256xf32> to vector<2x256xf32>
    %c1_7 = arith.constant 1 : index
    %c0_8 = arith.constant 0 : index
    %c0_9 = arith.constant 0 : index
    %6 = vector.load %arg2[%c1_7, %c0_8, %c0_9] : memref<2x2x256xf32, #tpu.memory_space<vmem>>, vector<1x2x256xf32>
    %7 = vector.shape_cast %6 : vector<1x2x256xf32> to vector<2x256xf32>
    %8 = tpu.concatenate %1, %3, %5, %7 in 0 : vector<2x256xf32>, vector<2x256xf32>, vector<2x256xf32>, vector<2x256xf32> -> vector<8x256xf32>
    %c17_i32 = arith.constant 17 : i32
    %9 = tpu.dynamic_rotate %8 by %c17_i32 dim 1 : vector<8x256xf32>, i32 -> vector<8x256xf32>
    %c0_10 = arith.constant 0 : index
    %c0_11 = arith.constant 0 : index
    %10 = vector.load %arg4[%c0_10, %c0_11] : memref<24x256xf32, #tpu.memory_space<vmem>>, vector<1x256xf32>
    %11 = vector.broadcast %10 : vector<1x256xf32> to vector<8x256xf32>
    %12 = arith.mulf %9, %11 : vector<8x256xf32>
    %c0_12 = arith.constant 0 : index
    %c0_13 = arith.constant 0 : index
    %13 = vector.load %arg6[%c0_12, %c0_13] : memref<96x256xf32, #tpu.memory_space<vmem>>, vector<8x256xf32>
    tpu.vector_store %arg6[%c0_12, %c0_13], %12 {strides = array<i32>} : memref<96x256xf32, #tpu.memory_space<vmem>>, vector<8x256xf32>,
    %c16_i32 = arith.constant 16 : i32
    %14 = tpu.dynamic_rotate %8 by %c16_i32 dim 1 : vector<8x256xf32>, i32 -> vector<8x256xf32>
    %c1_14 = arith.constant 1 : index
    %c0_15 = arith.constant 0 : index
    %15 = vector.load %arg4[%c1_14, %c0_15] : memref<24x256xf32, #tpu.memory_space<vmem>>, vector<1x256xf32>
    %16 = vector.broadcast %15 : vector<1x256xf32> to vector<8x256xf32>
    %17 = arith.mulf %14, %16 : vector<8x256xf32>
    %c8 = arith.constant 8 : index
    %c0_16 = arith.constant 0 : index
    %18 = vector.load %arg6[%c8, %c0_16] : memref<96x256xf32, #tpu.memory_space<vmem>>, vector<8x256xf32>
    tpu.vector_store %arg6[%c8, %c0_16], %17 {strides = array<i32>} : memref<96x256xf32, #tpu.memory_space<vmem>>, vector<8x256xf32>,
    %c15_i32 = arith.constant 15 : i32
    %19 = tpu.dynamic_rotate %8 by %c15_i32 dim 1 : vector<8x256xf32>, i32 -> vector<8x256xf32>
    %c2 = arith.constant 2 : index
    %c0_17 = arith.constant 0 : index
    %20 = vector.load %arg4[%c2, %c0_17] : memref<24x256xf32, #tpu.memory_space<vmem>>, vector<1x256xf32>
    %21 = vector.broadcast %20 : vector<1x256xf32> to vector<8x256xf32>
    %22 = arith.mulf %19, %21 : vector<8x256xf32>
    %c16 = arith.constant 16 : index
    %c0_18 = arith.constant 0 : index
    %23 = vector.load %arg6[%c16, %c0_18] : memref<96x256xf32, #tpu.memory_space<vmem>>, vector<8x256xf32>
    tpu.vector_store %arg6[%c16, %c0_18], %22 {strides = array<i32>} : memref<96x256xf32, #tpu.memory_space<vmem>>, vector<8x256xf32>,
    %c1_i32 = arith.constant 1 : i32
    %24 = tpu.dynamic_rotate %8 by %c1_i32 dim 1 : vector<8x256xf32>, i32 -> vector<8x256xf32>
    %c3 = arith.constant 3 : index
    %c0_19 = arith.constant 0 : index
    %25 = vector.load %arg4[%c3, %c0_19] : memref<24x256xf32, #tpu.memory_space<vmem>>, vector<1x256xf32>
    %26 = vector.broadcast %25 : vector<1x256xf32> to vector<8x256xf32>
    %27 = arith.mulf %24, %26 : vector<8x256xf32>
    %c24 = arith.constant 24 : index
    %c0_20 = arith.constant 0 : index
    %28 = vector.load %arg6[%c24, %c0_20] : memref<96x256xf32, #tpu.memory_space<vmem>>, vector<8x256xf32>
    tpu.vector_store %arg6[%c24, %c0_20], %27 {strides = array<i32>} : memref<96x256xf32, #tpu.memory_space<vmem>>, vector<8x256xf32>,
    %c32 = arith.constant 32 : index
    %c0_21 = arith.constant 0 : index
    %29 = vector.load %arg6[%c32, %c0_21] : memref<96x256xf32, #tpu.memory_space<vmem>>, vector<8x256xf32>
    tpu.vector_store %arg6[%c32, %c0_21], %8 {strides = array<i32>} : memref<96x256xf32, #tpu.memory_space<vmem>>, vector<8x256xf32>,
    %c255_i32 = arith.constant 255 : i32
    %30 = tpu.dynamic_rotate %8 by %c255_i32 dim 1 : vector<8x256xf32>, i32 -> vector<8x256xf32>
    %c5 = arith.constant 5 : index
    %c0_22 = arith.constant 0 : index
    %31 = vector.load %arg4[%c5, %c0_22] : memref<24x256xf32, #tpu.memory_space<vmem>>, vector<1x256xf32>
    %32 = vector.broadcast %31 : vector<1x256xf32> to vector<8x256xf32>
    %33 = arith.mulf %30, %32 : vector<8x256xf32>
    %c40 = arith.constant 40 : index
    %c0_23 = arith.constant 0 : index
    %34 = vector.load %arg6[%c40, %c0_23] : memref<96x256xf32, #tpu.memory_space<vmem>>, vector<8x256xf32>
    tpu.vector_store %arg6[%c40, %c0_23], %33 {strides = array<i32>} : memref<96x256xf32, #tpu.memory_space<vmem>>, vector<8x256xf32>,
    %c241_i32 = arith.constant 241 : i32
    %35 = tpu.dynamic_rotate %8 by %c241_i32 dim 1 : vector<8x256xf32>, i32 -> vector<8x256xf32>
    %c6 = arith.constant 6 : index
    %c0_24 = arith.constant 0 : index
    %36 = vector.load %arg4[%c6, %c0_24] : memref<24x256xf32, #tpu.memory_space<vmem>>, vector<1x256xf32>
    %37 = vector.broadcast %36 : vector<1x256xf32> to vector<8x256xf32>
    %38 = arith.mulf %35, %37 : vector<8x256xf32>
    %c48 = arith.constant 48 : index
    %c0_25 = arith.constant 0 : index
    %39 = vector.load %arg6[%c48, %c0_25] : memref<96x256xf32, #tpu.memory_space<vmem>>, vector<8x256xf32>
    tpu.vector_store %arg6[%c48, %c0_25], %38 {strides = array<i32>} : memref<96x256xf32, #tpu.memory_space<vmem>>, vector<8x256xf32>,
    %c240_i32 = arith.constant 240 : i32
    %40 = tpu.dynamic_rotate %8 by %c240_i32 dim 1 : vector<8x256xf32>, i32 -> vector<8x256xf32>
    %c7 = arith.constant 7 : index
    %c0_26 = arith.constant 0 : index
    %41 = vector.load %arg4[%c7, %c0_26] : memref<24x256xf32, #tpu.memory_space<vmem>>, vector<1x256xf32>
    %42 = vector.broadcast %41 : vector<1x256xf32> to vector<8x256xf32>
    %43 = arith.mulf %40, %42 : vector<8x256xf32>
    %c56 = arith.constant 56 : index
    %c0_27 = arith.constant 0 : index
    %44 = vector.load %arg6[%c56, %c0_27] : memref<96x256xf32, #tpu.memory_space<vmem>>, vector<8x256xf32>
    tpu.vector_store %arg6[%c56, %c0_27], %43 {strides = array<i32>} : memref<96x256xf32, #tpu.memory_space<vmem>>, vector<8x256xf32>,
    %c239_i32 = arith.constant 239 : i32
    %45 = tpu.dynamic_rotate %8 by %c239_i32 dim 1 : vector<8x256xf32>, i32 -> vector<8x256xf32>
    %c8_28 = arith.constant 8 : index
    %c0_29 = arith.constant 0 : index
    %46 = vector.load %arg4[%c8_28, %c0_29] : memref<24x256xf32, #tpu.memory_space<vmem>>, vector<1x256xf32>
    %47 = vector.broadcast %46 : vector<1x256xf32> to vector<8x256xf32>
    %48 = arith.mulf %45, %47 : vector<8x256xf32>
    %c64 = arith.constant 64 : index
    %c0_30 = arith.constant 0 : index
    %49 = vector.load %arg6[%c64, %c0_30] : memref<96x256xf32, #tpu.memory_space<vmem>>, vector<8x256xf32>
    tpu.vector_store %arg6[%c64, %c0_30], %48 {strides = array<i32>} : memref<96x256xf32, #tpu.memory_space<vmem>>, vector<8x256xf32>,
    %c0_31 = arith.constant 0 : index
    %c0_32 = arith.constant 0 : index
    %50 = vector.load %arg4[%c0_31, %c0_32] : memref<24x256xf32, #tpu.memory_space<vmem>>, vector<24x256xf32>
    %c72 = arith.constant 72 : index
    %c0_33 = arith.constant 0 : index
    %51 = vector.load %arg6[%c72, %c0_33] : memref<96x256xf32, #tpu.memory_space<vmem>>, vector<24x256xf32>
    tpu.vector_store %arg6[%c72, %c0_33], %50 {strides = array<i32>} : memref<96x256xf32, #tpu.memory_space<vmem>>, vector<24x256xf32>,
    %c0_34 = arith.constant 0 : index
    %c0_35 = arith.constant 0 : index
    %c0_36 = arith.constant 0 : index
    %52 = vector.load %arg3[%c0_34, %c0_35, %c0_36] : memref<1x8x96xbf16, #tpu.memory_space<vmem>>, vector<1x8x96xbf16>
    %53 = vector.shape_cast %52 : vector<1x8x96xbf16> to vector<8x96xbf16>
    %c0_37 = arith.constant 0 : index
    %c0_38 = arith.constant 0 : index
    %54 = vector.load %arg6[%c0_37, %c0_38] : memref<96x256xf32, #tpu.memory_space<vmem>>, vector<96x256xf32>
    %55 = arith.truncf %54 : vector<96x256xf32> to vector<96x256xbf16>
    %cst = arith.constant dense<0.000000e+00> : vector<8x256xf32>
    %56 = tpu.matmul %53, %55, %cst {dimension_numbers = #tpu.dot_dimension_numbers<[1], [0], [0], [1], [0, 0, 1, 1], [], []>} : vector<8x96xbf16>, vector<96x256xbf16>, vector<8x256xf32> -> vector<8x256xf32>
    %cst_39 = arith.constant 5.000000e-01 : f32
    %57 = vector.broadcast %cst_39 : f32 to vector<8x256xf32>
    %58 = arith.mulf %57, %56 : vector<8x256xf32>
    %59 = math.tanh %58 : vector<8x256xf32>
    %cst_40 = arith.constant 5.000000e-01 : f32
    %60 = vector.broadcast %cst_40 : f32 to vector<8x256xf32>
    %61 = arith.mulf %60, %59 : vector<8x256xf32>
    %cst_41 = arith.constant 5.000000e-01 : f32
    %62 = vector.broadcast %cst_41 : f32 to vector<8x256xf32>
    %63 = arith.addf %61, %62 : vector<8x256xf32>
    %c0_42 = arith.constant 0 : index
    %c0_43 = arith.constant 0 : index
    %c0_44 = arith.constant 0 : index
    %64 = vector.load %arg5[%c0_42, %c0_43, %c0_44] : memref<1x8x256xf32, #tpu.memory_space<vmem>>, vector<1x8x256xf32>
    %65 = vector.shape_cast %64 : vector<1x8x256xf32> to vector<8x256xf32>
    %66 = vector.shape_cast %63 : vector<8x256xf32> to vector<1x8x256xf32>
    tpu.vector_store %arg5[%c0_42, %c0_43, %c0_44], %66 {strides = array<i32>} : memref<1x8x256xf32, #tpu.memory_space<vmem>>, vector<1x8x256xf32>,
    return
  }
  func.func @transform_0(%arg0: i32) -> (i32, i32, i32) {
    %c0_i32 = arith.constant 0 : i32
    %c0_i32_0 = arith.constant 0 : i32
    %c0_i32_1 = arith.constant 0 : i32
    return %arg0, %c0_i32, %c0_i32_0 : i32, i32, i32
  }
  func.func @transform_1(%arg0: i32) -> (i32, i32, i32) {
    %c0_i32 = arith.constant 0 : i32
    %c0_i32_0 = arith.constant 0 : i32
    %c0_i32_1 = arith.constant 0 : i32
    return %arg0, %c0_i32, %c0_i32_0 : i32, i32, i32
  }
  func.func @transform_2(%arg0: i32) -> (i32, i32, i32) {
    %c0_i32 = arith.constant 0 : i32
    %c0_i32_0 = arith.constant 0 : i32
    %c0_i32_1 = arith.constant 0 : i32
    return %arg0, %c0_i32, %c0_i32_0 : i32, i32, i32
  }
  func.func @transform_3(%arg0: i32) -> (i32, i32) {
    %c0_i32 = arith.constant 0 : i32
    %c0_i32_0 = arith.constant 0 : i32
    %c0_i32_1 = arith.constant 0 : i32
    return %c0_i32, %c0_i32_0 : i32, i32
  }
  func.func @transform_4(%arg0: i32) -> (i32, i32, i32) {
    %c0_i32 = arith.constant 0 : i32
    %c0_i32_0 = arith.constant 0 : i32
    %c0_i32_1 = arith.constant 0 : i32
    return %arg0, %c0_i32, %c0_i32_0 : i32, i32, i32
  }
}

</mosaic_0001>

<llo_original>
// kernel: mda_forward.1
$region0: #{mda_forward.1}
  #allocation0 [shape = 'u32[]', space=smem, size = 0x4, offset = 0x4, fixed_abs, tag = 'smem constant byte address 0x4 - core index']
  #allocation1 [shape = 'u32[144,128]{1,0:T(1,128)}', space=vmem, size = 0x12000, scoped, tag = 'internal scratch']
  #allocation2 [shape = 'f32[96,256]{1,0:T(8,128)}', space=vmem, size = 0x18000, scoped, tag = 'scratch operand']
  %s0 = inlined_call_operand.vmem [shape: f32[2,2,256], index: 0, kind: input, shape index: {}]
  %s1 = inlined_call_operand.vmem [shape: f32[2,2,256], index: 1, kind: input, shape index: {}]
  %s2 = inlined_call_operand.vmem [shape: bf16[1,8,96], index: 2, kind: input, shape index: {}]
  %s3 = inlined_call_operand.vmem [shape: f32[24,256], index: 3, kind: input, shape index: {}]
  %s4 = inlined_call_operand.vmem [shape: f32[1,8,256], index: 4, kind: output, shape index: {}]
  %s5 = sld [smem:[#allocation0]]
  $region26: #{mda_forward.1} parent=0
    _
  %s7 = ssub.s32 1, %s5
  %s8 = scalar_select 0, %s7, %s5
  // Predicated region
  $region2: #{mda_forward.1} parent=0 // pred_check
    _
  $region3: #{mda_forward.1} parent=0 // pred_check_branch
    %10 = sbr.rel (0) target = $region5
  $region4: #{mda_forward.1} parent=0 // pred_region
    _
  $region5: #{mda_forward.1} parent=0 // pred_fallthru
    _
  // Predicated region
  $region6: #{mda_forward.1} parent=0 // pred_check
    _
  $region7: #{mda_forward.1} parent=0 // pred_check_branch
    %12 = sbr.rel (0) target = $region9
  $region8: #{mda_forward.1} parent=0 // pred_region
    _
  $region9: #{mda_forward.1} parent=0 // pred_fallthru
    _
  // Predicated region
  $region10: #{mda_forward.1} parent=0 // pred_check
    _
  $region11: #{mda_forward.1} parent=0 // pred_check_branch
    %14 = sbr.rel (0) target = $region13
  $region12: #{mda_forward.1} parent=0 // pred_region
    _
  $region13: #{mda_forward.1} parent=0 // pred_fallthru
    _
  // Predicated region
  $region14: #{mda_forward.1} parent=0 // pred_check
    _
  $region15: #{mda_forward.1} parent=0 // pred_check_branch
    %16 = sbr.rel (0) target = $region17
  $region16: #{mda_forward.1} parent=0 // pred_region
    _
  $region17: #{mda_forward.1} parent=0 // pred_fallthru
    _
  %v18 = vld [vmem:[%s0] sm:$0xf]
  %v19 = vld [vmem:[%s1] sm:$0xf]
  %s20 = scalar_lea.vmem %s0, 4
  %v21 = vld [vmem:[%s20] sm:$0xf]
  %s22 = scalar_lea.vmem %s1, 4
  %v23 = vld [vmem:[%s22] sm:$0xf]
  %v26 = vunpack.c.l.s4 1983009808
  %v27 = vunpack.c.0.s8 %v26
  %v28 = vlaneseq
  %v29 = vshrl.u32 %v28, 7
  %v30 = vsub.s32 %v27, %v29
  %v31 = vrot.slane %v18, %v30
  %v32 = vcombine.high %v31, %v31
  %v36 = vcombine.low %v19, %v19
  %v38 = vunpack.c.l.s4 1983009808
  %v39 = vunpack.c.0.s8 %v38
  %v40 = vlaneseq
  %v41 = vshrl.u32 %v40, 7
  %v42 = vsub.s32 %v39, %v41
  %v43 = vrot.slane %v36, %v42
  %v44 = vcombine.high %v43, %v43
  %v49 = vunpack.c.l.s4 1983009808
  %v50 = vunpack.c.0.s8 %v49
  %v51 = vlaneseq
  %v52 = vshrl.u32 %v51, 7
  %v53 = vsub.s32 %v50, %v52
  %v54 = vrot.slane %v21, %v53
  %v55 = vcombine.low %v54, %v54
  %v59 = vcombine.low %v23, %v23
  %v61 = vunpack.c.l.s4 1983009808
  %v62 = vunpack.c.0.s8 %v61
  %v63 = vlaneseq
  %v64 = vshrl.u32 %v63, 7
  %v65 = vsub.s32 %v62, %v64
  %v66 = vrot.slane %v59, %v65
  %v67 = vcombine.low %v66, %v66
  %vm70 = vcmask 1041408
  %v71 = vsel %vm70, %v31, %v43
  %v72 = vsel %vm70, %v32, %v44
  %vm73 = vcmask 1043456
  %v74 = vsel %vm73, %v71, %v55
  %v75 = vsel %vm73, %v72, %v54
  %vm76 = vcmask 1045504
  %v77 = vsel %vm76, %v74, %v67
  %v78 = vsel %vm76, %v75, %v66
  %79 = vrot.lane.b32.xlu0 %v77, 17
  %v80 = vpop.permute.xlu0 %79
  %81 = vrot.lane.b32.xlu0 %v78, 17
  %v82 = vpop.permute.xlu0 %81
  %v83 = vlaneseq
  %v84 = vand.u32 %v83, 127
  %vm85 = vcmp.lt.s32.totalorder %v84, 17
  %v86 = vsel %vm85, %v80, %v82
  %v87 = vsel %vm85, %v82, %v80
  %v88 = vld [vmem:[%s3] ss:$8 sm:$0x3]
  %v90 = vlaneseq
  %v91 = vshrl.u32 %v90, 7
  %v92 = vsub.s32 0, %v91
  %v93 = vrot.slane %v88, %v92
  %v94 = vlaneseq
  %v95 = vshrl.u32 %v94, 7
  %v96 = vsub.s32 1, %v95
  %v97 = vrot.slane %v88, %v96
  %v100 = vmul.f32 %v87, %v93
  %v101 = vmul.f32 %v86, %v97
  %102 = vst [vmem:[#allocation2] sm:$0xff] %v100
  %103 = vst [vmem:[#allocation2 + $0x8] sm:$0xff] %v101
  %104 = vrot.lane.b32.xlu0 %v77, 16
  %v105 = vpop.permute.xlu0 %104
  %106 = vrot.lane.b32.xlu0 %v78, 16
  %v107 = vpop.permute.xlu0 %106
  %vm108 = vcmp.lt.s32.totalorder %v84, 16
  %v109 = vsel %vm108, %v105, %v107
  %v110 = vsel %vm108, %v107, %v105
  %s111 = scalar_lea.vmem %s3, 1
  %v112 = vld [vmem:[%s111] ss:$8 sm:$0x3]
  %v114 = vlaneseq
  %v115 = vshrl.u32 %v114, 7
  %v116 = vsub.s32 0, %v115
  %v117 = vrot.slane %v112, %v116
  %v118 = vlaneseq
  %v119 = vshrl.u32 %v118, 7
  %v120 = vsub.s32 1, %v119
  %v121 = vrot.slane %v112, %v120
  %v124 = vmul.f32 %v110, %v117
  %v125 = vmul.f32 %v109, %v121
  %126 = vst [vmem:[#allocation2 + $0x10] sm:$0xff] %v124
  %127 = vst [vmem:[#allocation2 + $0x18] sm:$0xff] %v125
  %128 = vrot.lane.b32.xlu0 %v77, 15
  %v129 = vpop.permute.xlu0 %128
  %130 = vrot.lane.b32.xlu0 %v78, 15
  %v131 = vpop.permute.xlu0 %130
  %vm132 = vcmp.lt.s32.totalorder %v84, 15
  %v133 = vsel %vm132, %v129, %v131
  %v134 = vsel %vm132, %v131, %v129
  %s135 = scalar_lea.vmem %s3, 2
  %v136 = vld [vmem:[%s135] ss:$8 sm:$0x3]
  %v138 = vlaneseq
  %v139 = vshrl.u32 %v138, 7
  %v140 = vsub.s32 0, %v139
  %v141 = vrot.slane %v136, %v140
  %v142 = vlaneseq
  %v143 = vshrl.u32 %v142, 7
  %v144 = vsub.s32 1, %v143
  %v145 = vrot.slane %v136, %v144
  %v148 = vmul.f32 %v134, %v141
  %v149 = vmul.f32 %v133, %v145
  %150 = vst [vmem:[#allocation2 + $0x20] sm:$0xff] %v148
  %151 = vst [vmem:[#allocation2 + $0x28] sm:$0xff] %v149
  %152 = vrot.lane.b32.xlu0 %v77, 1
  %v153 = vpop.permute.xlu0 %152
  %154 = vrot.lane.b32.xlu0 %v78, 1
  %v155 = vpop.permute.xlu0 %154
  %vm156 = vcmp.lt.s32.totalorder %v84, 1
  %v157 = vsel %vm156, %v153, %v155
  %v158 = vsel %vm156, %v155, %v153
  %s159 = scalar_lea.vmem %s3, 3
  %v160 = vld [vmem:[%s159] ss:$8 sm:$0x3]
  %v162 = vlaneseq
  %v163 = vshrl.u32 %v162, 7
  %v164 = vsub.s32 0, %v163
  %v165 = vrot.slane %v160, %v164
  %v166 = vlaneseq
  %v167 = vshrl.u32 %v166, 7
  %v168 = vsub.s32 1, %v167
  %v169 = vrot.slane %v160, %v168
  %v172 = vmul.f32 %v158, %v165
  %v173 = vmul.f32 %v157, %v169
  %174 = vst [vmem:[#allocation2 + $0x30] sm:$0xff] %v172
  %175 = vst [vmem:[#allocation2 + $0x38] sm:$0xff] %v173
  %176 = vst [vmem:[#allocation2 + $0x40] sm:$0xff] %v77
  %177 = vst [vmem:[#allocation2 + $0x48] sm:$0xff] %v78
  %178 = vrot.lane.b32.xlu0 %v77, 127
  %v179 = vpop.permute.xlu0 %178
  %180 = vrot.lane.b32.xlu0 %v78, 127
  %v181 = vpop.permute.xlu0 %180
  %vm182 = vcmp.lt.s32.totalorder %v84, 127
  %v183 = vsel %vm182, %v179, %v181
  %v184 = vsel %vm182, %v181, %v179
  %s185 = scalar_lea.vmem %s3, 5
  %v186 = vld [vmem:[%s185] ss:$8 sm:$0x3]
  %v188 = vlaneseq
  %v189 = vshrl.u32 %v188, 7
  %v190 = vsub.s32 0, %v189
  %v191 = vrot.slane %v186, %v190
  %v192 = vlaneseq
  %v193 = vshrl.u32 %v192, 7
  %v194 = vsub.s32 1, %v193
  %v195 = vrot.slane %v186, %v194
  %v198 = vmul.f32 %v183, %v191
  %v199 = vmul.f32 %v184, %v195
  %200 = vst [vmem:[#allocation2 + $0x50] sm:$0xff] %v198
  %201 = vst [vmem:[#allocation2 + $0x58] sm:$0xff] %v199
  %202 = vrot.lane.b32.xlu0 %v77, 113
  %v203 = vpop.permute.xlu0 %202
  %204 = vrot.lane.b32.xlu0 %v78, 113
  %v205 = vpop.permute.xlu0 %204
  %vm206 = vcmp.lt.s32.totalorder %v84, 113
  %v207 = vsel %vm206, %v203, %v205
  %v208 = vsel %vm206, %v205, %v203
  %s209 = scalar_lea.vmem %s3, 6
  %v210 = vld [vmem:[%s209] ss:$8 sm:$0x3]
  %v212 = vlaneseq
  %v213 = vshrl.u32 %v212, 7
  %v214 = vsub.s32 0, %v213
  %v215 = vrot.slane %v210, %v214
  %v216 = vlaneseq
  %v217 = vshrl.u32 %v216, 7
  %v218 = vsub.s32 1, %v217
  %v219 = vrot.slane %v210, %v218
  %v222 = vmul.f32 %v207, %v215
  %v223 = vmul.f32 %v208, %v219
  %224 = vst [vmem:[#allocation2 + $0x60] sm:$0xff] %v222
  %225 = vst [vmem:[#allocation2 + $0x68] sm:$0xff] %v223
  %226 = vrot.lane.b32.xlu0 %v77, 112
  %v227 = vpop.permute.xlu0 %226
  %228 = vrot.lane.b32.xlu0 %v78, 112
  %v229 = vpop.permute.xlu0 %228
  %vm230 = vcmp.lt.s32.totalorder %v84, 112
  %v231 = vsel %vm230, %v227, %v229
  %v232 = vsel %vm230, %v229, %v227
  %s233 = scalar_lea.vmem %s3, 7
  %v234 = vld [vmem:[%s233] ss:$8 sm:$0x3]
  %v236 = vlaneseq
  %v237 = vshrl.u32 %v236, 7
  %v238 = vsub.s32 0, %v237
  %v239 = vrot.slane %v234, %v238
  %v240 = vlaneseq
  %v241 = vshrl.u32 %v240, 7
  %v242 = vsub.s32 1, %v241
  %v243 = vrot.slane %v234, %v242
  %v246 = vmul.f32 %v231, %v239
  %v247 = vmul.f32 %v232, %v243
  %248 = vst [vmem:[#allocation2 + $0x70] sm:$0xff] %v246
  %249 = vst [vmem:[#allocation2 + $0x78] sm:$0xff] %v247
  %250 = vrot.lane.b32.xlu0 %v77, 111
  %v251 = vpop.permute.xlu0 %250
  %252 = vrot.lane.b32.xlu0 %v78, 111
  %v253 = vpop.permute.xlu0 %252
  %vm254 = vcmp.lt.s32.totalorder %v84, 111
  %v255 = vsel %vm254, %v251, %v253
  %v256 = vsel %vm254, %v253, %v251
  %s257 = scalar_lea.vmem %s3, 16
  %v258 = vld [vmem:[%s257] ss:$8 sm:$0x3]
  %v260 = vlaneseq
  %v261 = vshrl.u32 %v260, 7
  %v262 = vsub.s32 0, %v261
  %v263 = vrot.slane %v258, %v262
  %v264 = vlaneseq
  %v265 = vshrl.u32 %v264, 7
  %v266 = vsub.s32 1, %v265
  %v267 = vrot.slane %v258, %v266
  %v270 = vmul.f32 %v255, %v263
  %v271 = vmul.f32 %v256, %v267
  %272 = vst [vmem:[#allocation2 + $0x80] sm:$0xff] %v270
  %273 = vst [vmem:[#allocation2 + $0x88] sm:$0xff] %v271
  %v274 = vld [vmem:[%s3] sm:$0xff]
  %v275 = vld [vmem:[%s3 + $0x8] sm:$0xff]
  %v276 = vld [vmem:[%s3 + $0x10] sm:$0xff]
  %v277 = vld [vmem:[%s3 + $0x18] sm:$0xff]
  %v278 = vld [vmem:[%s3 + $0x20] sm:$0xff]
  %v279 = vld [vmem:[%s3 + $0x28] sm:$0xff]
  %280 = vst [vmem:[#allocation2 + $0x90] sm:$0xff] %v274
  %281 = vst [vmem:[#allocation2 + $0x98] sm:$0xff] %v275
  %282 = vst [vmem:[#allocation2 + $0xa0] sm:$0xff] %v276
  %283 = vst [vmem:[#allocation2 + $0xa8] sm:$0xff] %v277
  %284 = vst [vmem:[#allocation2 + $0xb0] sm:$0xff] %v278
  %285 = vst [vmem:[#allocation2 + $0xb8] sm:$0xff] %v279
  %v286 = vld [vmem:[%s2] sm:$0xf]
  %v287 = vld [vmem:[#allocation2] sm:$0xff]
  %v288 = vld [vmem:[#allocation2 + $0x8] sm:$0xff]
  %v289 = vld [vmem:[#allocation2 + $0x10] sm:$0xff]
  %v290 = vld [vmem:[#allocation2 + $0x18] sm:$0xff]
  %v291 = vld [vmem:[#allocation2 + $0x20] sm:$0xff]
  %v292 = vld [vmem:[#allocation2 + $0x28] sm:$0xff]
  %v293 = vld [vmem:[#allocation2 + $0x30] sm:$0xff]
  %v294 = vld [vmem:[#allocation2 + $0x38] sm:$0xff]
  %v295 = vld [vmem:[#allocation2 + $0x40] sm:$0xff]
  %v296 = vld [vmem:[#allocation2 + $0x48] sm:$0xff]
  %v297 = vld [vmem:[#allocation2 + $0x50] sm:$0xff]
  %v298 = vld [vmem:[#allocation2 + $0x58] sm:$0xff]
  %v299 = vld [vmem:[#allocation2 + $0x60] sm:$0xff]
  %v300 = vld [vmem:[#allocation2 + $0x68] sm:$0xff]
  %v301 = vld [vmem:[#allocation2 + $0x70] sm:$0xff]
  %v302 = vld [vmem:[#allocation2 + $0x78] sm:$0xff]
  %v303 = vld [vmem:[#allocation2 + $0x80] sm:$0xff]
  %v304 = vld [vmem:[#allocation2 + $0x88] sm:$0xff]
  %v305 = vld [vmem:[#allocation2 + $0x90] sm:$0xff]
  %v306 = vld [vmem:[#allocation2 + $0x98] sm:$0xff]
  %v307 = vld [vmem:[#allocation2 + $0xa0] sm:$0xff]
  %v308 = vld [vmem:[#allocation2 + $0xa8] sm:$0xff]
  %v309 = vld [vmem:[#allocation2 + $0xb0] sm:$0xff]
  %v310 = vld [vmem:[#allocation2 + $0xb8] sm:$0xff]
  %v311 = vpack.c.bf16 %v289, %v287
  %v312 = vpack.c.bf16 %v290, %v288
  %v313 = vpack.c.bf16 %v293, %v291
  %v314 = vpack.c.bf16 %v294, %v292
  %v315 = vpack.c.bf16 %v297, %v295
  %v316 = vpack.c.bf16 %v298, %v296
  %v317 = vpack.c.bf16 %v301, %v299
  %v318 = vpack.c.bf16 %v302, %v300
  %v319 = vpack.c.bf16 %v305, %v303
  %v320 = vpack.c.bf16 %v306, %v304
  %v321 = vpack.c.bf16 %v309, %v307
  %v322 = vpack.c.bf16 %v310, %v308
  %vm323 = vcmask 785408
  %v325 = vsel %vm323, %v286, 0
  %327 = vmatprep.subr.bf16.mxu0 0
  %328 = vmatpush1.bf16.msra.mxu0 0
  %329 = vmatprep.subr.bf16.mxu0 0
  %330 = vmatpush1.bf16.msra.mxu0 0
  %331 = vmatprep.subr.bf16.mxu0 %v322
  %332 = vmatpush1.bf16.msra.mxu0 %v321
  %333 = vmatprep.subr.bf16.mxu0 %v320
  %334 = vmatpush1.bf16.msra.mxu0 %v319
  %335 = vmatprep.subr.bf16.mxu0 %v318
  %336 = vmatpush1.bf16.msra.mxu0 %v317
  %337 = vmatprep.subr.bf16.mxu0 %v316
  %338 = vmatpush1.bf16.msra.mxu0 %v315
  %339 = vmatprep.subr.bf16.mxu0 %v314
  %340 = vmatpush1.bf16.msra.mxu0 %v313
  %341 = vmatprep.subr.bf16.mxu0 %v312
  %342 = vmatpush1.bf16.msra.mxu0 %v311
  %343 = vmatprep.subr.bf16.mxu0 0
  %344 = vmatpush2.bf16.msra.mxu0 0
  %345 = vmatprep.subr.bf16.mxu0 0
  %346 = vmatpush2.bf16.msra.mxu0 0
  %347 = vmatprep.subr.bf16.mxu0 0
  %348 = vmatpush2.bf16.msra.mxu0 0
  %349 = vmatprep.subr.bf16.mxu0 0
  %350 = vmatpush2.bf16.msra.mxu0 0
  %351 = vmatprep.subr.bf16.mxu0 0
  %352 = vmatpush2.bf16.msra.mxu0 0
  %353 = vmatprep.subr.bf16.mxu0 0
  %354 = vmatpush2.bf16.msra.mxu0 0
  %355 = vmatprep.subr.bf16.mxu0 0
  %356 = vmatpush2.bf16.msra.mxu0 0
  %357 = vmatprep.subr.bf16.mxu0 0
  %358 = vmatpush2.bf16.msra.mxu0 0
  %359 = vmatprep.mubr.bf16.mxu0 0
  %360 = vmatmul.mubr.bf16.gmra.mxu0 %v325
  %v361 = vpop.f32.mrf.mxu0
  %v362 = vadd.f32 0.0, %v361
  %v363 = vpop.f32.mrf.mxu0
  %v364 = vadd.f32 0.0, %v363
  %v365 = vpop.f32.mrf.mxu0
  %v366 = vpop.f32.mrf.mxu0
  %367 = vdwg.mxu0
  %v368 = vmul.f32 %v362, 0.5
  %v369 = vmul.f32 %v364, 0.5
  %v370 = vtanh.pop %v368
  %v371 = vtanh.pop %v369
  %v372 = vmul.f32 %v370, 0.5
  %v373 = vmul.f32 %v371, 0.5
  %v374 = vadd.f32 %v372, 0.5
  %v375 = vadd.f32 %v373, 0.5
  %376 = vst [vmem:[%s4] sm:$0xff] %v374
  %377 = vst [vmem:[%s4 + $0x8] sm:$0xff] %v375
  // Predicated region
  $region18: #{mda_forward.1} parent=0 // pred_check
    _
  $region19: #{mda_forward.1} parent=0 // pred_check_branch
    %379 = sbr.rel (0) target = $region21
  $region20: #{mda_forward.1} parent=0 // pred_region
    _
  $region21: #{mda_forward.1} parent=0 // pred_fallthru
    _
  // Predicated region
  $region22: #{mda_forward.1} parent=0 // pred_check
    _
  $region23: #{mda_forward.1} parent=0 // pred_check_branch
    %381 = sbr.rel (0) target = $region25
  $region24: #{mda_forward.1} parent=0 // pred_region
    _
  $region25: #{mda_forward.1} parent=0 // pred_fallthru
    _

</llo_original>
